<compile_context>
chip_gen: v5e
topology: v5e:2x2
jax: 0.10.0
libtpu: 0.0.40
codegen_flags: <defaults>
</compile_context>

<pallas_src>
import functools

import numpy as np
import jax
import jax.numpy as jnp
from jax.experimental import pallas as pl
from jax.experimental.pallas import tpu as pltpu

_LANE = 128
_SUBLANE = 8


def _dice_partial_kernel(x_ref, lab_ref, out_ref,
                         inter_acc, sq_acc, targ_acc,
                         *, apply_softmax, mask_pad):
    # x_ref:   (C, S, 128)  scores for one pixel tile of one batch element
    # lab_ref: (S, 128)     class labels in their native dtype (pad = -1)
    # out_ref: (3, C)       per-(batch, split) partial sums
    # *_acc:   (C, 8, 128)  small VMEM accumulators (one vreg per class)
    j = pl.program_id(2)

    @pl.when(j == 0)
    def _():
        inter_acc[...] = jnp.zeros_like(inter_acc)
        sq_acc[...] = jnp.zeros_like(sq_acc)
        targ_acc[...] = jnp.zeros_like(targ_acc)

    x = x_ref[...].astype(jnp.float32)        # cast in-kernel (native-dtype DMA)
    lab = lab_ref[...]                        # (S, 128), native dtype

    if apply_softmax:
        # Per-pixel softmax over the class axis (leading dim => VPU/EUP only).
        m = jnp.max(x, axis=0, keepdims=True)
        e = jnp.exp(x - m)
        denom = jnp.sum(e, axis=0, keepdims=True)
        x = e * pl.reciprocal(denom, approx=True)   # EUP slot, nearly free

    if mask_pad:
        # Padded pixels carry label -1; zero their (softmaxed) scores so they
        # do not contribute to sum(score^2).
        x = jnp.where((lab >= 0)[None, :, :], x, 0.0)

    # Compare labels in their own dtype (float labels compared to float class
    # ids == PyTorch `target == i` semantics; no int truncation).
    class_ids = jax.lax.broadcasted_iota(jnp.int32, x.shape, 0).astype(lab.dtype)
    mask_f = (lab[None, :, :] == class_ids).astype(jnp.float32)   # one-hot

    c_dim, s_dim, l_dim = x.shape
    folds = s_dim // _SUBLANE

    def fold(a):
        # (C, S, 128) -> (C, 8, 128): layout-preserving partial sum over the
        # sublane-tile axis — pure vreg adds on the VPU, no cross-lane work.
        return a.reshape(c_dim, folds, _SUBLANE, l_dim).sum(axis=1)

    inter_acc[...] += fold(mask_f * x)
    sq_acc[...] += fold(x * x)
    targ_acc[...] += fold(mask_f)

    @pl.when(j == pl.num_programs(2) - 1)
    def _():
        def rsum(a):  # (C, 8, 128) -> (C,)  one-time epilogue reduction (XLU)
            return jnp.sum(jnp.sum(a, axis=2), axis=1)

        out_ref[0, :] = rsum(inter_acc[...])
        out_ref[1, :] = rsum(sq_acc[...])
        out_ref[2, :] = rsum(targ_acc[...])


def _sublane_mult(dtype):
    # Sublane granularity so sub-32-bit dtypes keep native packed tiles.
    itemsize = np.dtype(dtype).itemsize
    return max(_SUBLANE, (4 * _SUBLANE) // max(1, itemsize))


def _vmem_budget_bytes():
    # Derive the per-step input working-set budget from the actual chip
    # (v7x has only 64 MiB physical per core); fall back conservatively.
    phys = None
    try:
        info = pltpu.get_tpu_info()
        phys = getattr(info, "vmem_capacity_bytes", None)
    except Exception:
        phys = None
    if not phys:
        phys = 64 * 1024 * 1024
    return int(min(phys // 2, 24 * 1024 * 1024))


def dice_loss(inputs, target, n_classes, weight=None, softmax=False):
    """inputs: (N, C, H, W) float scores; target: (N, 1, H, W) integer-valued labels."""
    N, C, H, W = inputs.shape
    assert C == n_classes, 'predict & target shape do not match'
    HW = H * W

    # Free views only -- no dtype casts, no transpose.
    x = inputs.reshape(N, C, HW)
    lab = target.reshape(N, HW)

    x_bytes = np.dtype(x.dtype).itemsize
    lab_bytes = np.dtype(lab.dtype).itemsize
    sub_mult = max(_sublane_mult(x.dtype), _sublane_mult(lab.dtype))
    pad_mult = sub_mult * _LANE

    # Pad at most (sub_mult*128 - 1) pixels so HW is viewable as (s_total, 128)
    # with sublane-aligned s_total; no pad at all when HW is already aligned.
    p_pad = pl.cdiv(HW, pad_mult) * pad_mult
    padded = p_pad != HW
    if padded:
        x = jnp.pad(x, ((0, 0), (0, 0), (0, p_pad - HW)))
        lab = jnp.pad(lab, ((0, 0), (0, p_pad - HW)), constant_values=-1)

    s_total = p_pad // _LANE
    x = x.reshape(N, C, s_total, _LANE)
    lab = lab.reshape(N, s_total, _LANE)

    # ---- tile selection ----------------------------------------------------
    budget = _vmem_budget_bytes()
    # bytes per sublane-row of the double-buffered input windows (x + labels)
    per_sublane = _LANE * (2 * C * x_bytes + 2 * lab_bytes)
    cap = (budget // per_sublane) // sub_mult * sub_mult
    cap = max(sub_mult, min(1024, cap))
    candidates = [c for c in range(sub_mult, cap + 1, sub_mult) if s_total % c == 0]
    s_tile = candidates[-1]
    # Prefer a tile that yields an even tile count (so the pixel axis can be
    # split across v7x's two TensorCores) if it is at least half as large.
    even = [c for c in candidates if (s_total // c) % 2 == 0]
    if even and even[-1] * 2 >= s_tile:
        s_tile = even[-1]
    num_tiles = s_total // s_tile
    n_split = 2 if num_tiles % 2 == 0 else 1
    tps = num_tiles // n_split

    work_bytes = per_sublane * s_tile + 3 * C * _SUBLANE * _LANE * 4 + 64 * 1024
    vmem_limit = int(min(max(2 * work_bytes, 16 * 1024 * 1024), 32 * 1024 * 1024))

    kernel = functools.partial(
        _dice_partial_kernel,
        apply_softmax=bool(softmax),
        mask_pad=bool(padded and softmax))

    sums = pl.pallas_call(
        kernel,
        out_shape=jax.ShapeDtypeStruct((N, n_split, 3, C), jnp.float32),
        grid=(N, n_split, tps),
        in_specs=[
            pl.BlockSpec((None, C, s_tile, _LANE),
                         lambda n, c, j: (n, 0, c * tps + j, 0)),
            pl.BlockSpec((None, s_tile, _LANE),
                         lambda n, c, j: (n, c * tps + j, 0)),
        ],
        out_specs=pl.BlockSpec((None, None, 3, C), lambda n, c, j: (n, c, 0, 0)),
        scratch_shapes=[
            pltpu.VMEM((C, _SUBLANE, _LANE), jnp.float32),
            pltpu.VMEM((C, _SUBLANE, _LANE), jnp.float32),
            pltpu.VMEM((C, _SUBLANE, _LANE), jnp.float32),
        ],
        compiler_params=pltpu.CompilerParams(
            dimension_semantics=("parallel", "parallel", "arbitrary"),
            vmem_limit_bytes=vmem_limit),
    )(x, lab)

    # Tiny JAX epilogue: combine partial sums, dice formula, weights, mean.
    inter = jnp.sum(sums[:, :, 0, :], axis=(0, 1))
    score_sq = jnp.sum(sums[:, :, 1, :], axis=(0, 1))
    targ = jnp.sum(sums[:, :, 2, :], axis=(0, 1))

    if weight is None:
        weight = [1.0] * n_classes
    w = jnp.asarray(weight, dtype=jnp.float32)

    smooth = jnp.float32(1e-10)
    dice = 1.0 - inter / (score_sq + targ + smooth)
    return jnp.sum(dice * w) / jnp.float32(n_classes)


def _dice_loss_ref(inputs, target, n_classes, weight=None, softmax=False):
    # Pure-JAX reference mirroring the PyTorch module.
    if softmax:
        inputs = jax.nn.softmax(inputs, axis=1)
    if weight is None:
        weight = [1.0] * n_classes
    onehot = jnp.concatenate(
        [(target == i).astype(jnp.float32) for i in range(n_classes)], axis=1)
    smooth = 1e-10
    loss = 0.0
    for i in range(n_classes):
        s = inputs[:, i].astype(jnp.float32)
        t = onehot[:, i]
        inter = jnp.sum(s * t)
        union = jnp.sum(s * s) + jnp.sum(t * t) + smooth
        loss = loss + (1.0 - inter / union) * weight[i]
    return loss / n_classes


if __name__ == "__main__":
    key = jax.random.PRNGKey(0)
    k1, k2 = jax.random.split(key)

    N, C, H, W = 2, 4, 16, 16
    inputs = jax.random.uniform(k1, (N, C, H, W), dtype=jnp.float32)
    target = jax.random.randint(k2, (N, 1, H, W), 0, C).astype(jnp.float32)

    loss = dice_loss(inputs, target, n_classes=C, softmax=False)
    loss = jax.block_until_ready(loss)
    ref = _dice_loss_ref(inputs, target, n_classes=C, softmax=False)
    assert jnp.allclose(loss, ref, rtol=1e-5, atol=1e-6), (loss, ref)

    # Softmax branch (exercises approx reciprocal + padded-pixel masking);
    # tolerance loosened slightly for the EUP approximate reciprocal.
    loss_sm = dice_loss(inputs, target, n_classes=C, softmax=True)
    loss_sm = jax.block_until_ready(loss_sm)
    ref_sm = _dice_loss_ref(inputs, target, n_classes=C, softmax=True)
    assert jnp.allclose(loss_sm, ref_sm, rtol=5e-3, atol=1e-4), (loss_sm, ref_sm)

    # Weighted variant.
    wts = [0.5, 1.0, 2.0, 1.5]
    loss_w = jax.block_until_ready(dice_loss(inputs, target, C, weight=wts))
    ref_w = _dice_loss_ref(inputs, target, C, weight=wts)
    assert jnp.allclose(loss_w, ref_w, rtol=1e-5, atol=1e-6), (loss_w, ref_w)

    print("KERNEL_OK")
</pallas_src>

<mosaic_0001>
module attributes {stable_mosaic.version = 11 : i64} {
  func.func @_dice_partial_kernel(%arg0: i32, %arg1: i32, %arg2: i32, %arg3: memref<1x4x8x128xf32, #tpu.memory_space<vmem>>, %arg4: memref<1x8x128xf32, #tpu.memory_space<vmem>>, %arg5: memref<1x1x3x4xf32, #tpu.memory_space<vmem>>, %arg6: memref<4x8x128xf32, #tpu.memory_space<vmem>>, %arg7: memref<4x8x128xf32, #tpu.memory_space<vmem>>, %arg8: memref<4x8x128xf32, #tpu.memory_space<vmem>>) attributes {dimension_semantics = [#tpu.dimension_semantics<parallel>, #tpu.dimension_semantics<parallel>, #tpu.dimension_semantics<arbitrary>], iteration_bounds = array<i64: 2, 1, 1>, scalar_prefetch = 0 : i64, scratch_operands = 3 : i64, tpu.core_type = #tpu.core_type<tc>, window_params = [{transform_indices = @transform_0, window_bounds = array<i64: 1, 4, 8, 128>}, {transform_indices = @transform_1, window_bounds = array<i64: 1, 8, 128>}, {transform_indices = @transform_2, window_bounds = array<i64: 1, 1, 3, 4>}]} {
    %c0_i32 = arith.constant 0 : i32
    %0 = arith.cmpi eq, %arg2, %c0_i32 : i32
    %1 = arith.extui %0 : i1 to i32
    %c0_i32_0 = arith.constant 0 : i32
    %2 = arith.cmpi ne, %1, %c0_i32_0 : i32
    scf.if %2 {
      %cst_29 = arith.constant 0.000000e+00 : f32
      %34 = vector.broadcast %cst_29 : f32 to vector<4x8x128xf32>
      %c0_30 = arith.constant 0 : index
      %c0_31 = arith.constant 0 : index
      %c0_32 = arith.constant 0 : index
      %35 = vector.load %arg6[%c0_30, %c0_31, %c0_32] : memref<4x8x128xf32, #tpu.memory_space<vmem>>, vector<4x8x128xf32>
      tpu.vector_store %arg6[%c0_30, %c0_31, %c0_32], %34 {strides = array<i32>} : memref<4x8x128xf32, #tpu.memory_space<vmem>>, vector<4x8x128xf32>,
      %cst_33 = arith.constant 0.000000e+00 : f32
      %36 = vector.broadcast %cst_33 : f32 to vector<4x8x128xf32>
      %c0_34 = arith.constant 0 : index
      %c0_35 = arith.constant 0 : index
      %c0_36 = arith.constant 0 : index
      %37 = vector.load %arg7[%c0_34, %c0_35, %c0_36] : memref<4x8x128xf32, #tpu.memory_space<vmem>>, vector<4x8x128xf32>
      tpu.vector_store %arg7[%c0_34, %c0_35, %c0_36], %36 {strides = array<i32>} : memref<4x8x128xf32, #tpu.memory_space<vmem>>, vector<4x8x128xf32>,
      %cst_37 = arith.constant 0.000000e+00 : f32
      %38 = vector.broadcast %cst_37 : f32 to vector<4x8x128xf32>
      %c0_38 = arith.constant 0 : index
      %c0_39 = arith.constant 0 : index
      %c0_40 = arith.constant 0 : index
      %39 = vector.load %arg8[%c0_38, %c0_39, %c0_40] : memref<4x8x128xf32, #tpu.memory_space<vmem>>, vector<4x8x128xf32>
      tpu.vector_store %arg8[%c0_38, %c0_39, %c0_40], %38 {strides = array<i32>} : memref<4x8x128xf32, #tpu.memory_space<vmem>>, vector<4x8x128xf32>,
    } else {
    }
    %c0 = arith.constant 0 : index
    %c0_1 = arith.constant 0 : index
    %c0_2 = arith.constant 0 : index
    %c0_3 = arith.constant 0 : index
    %3 = vector.load %arg3[%c0, %c0_1, %c0_2, %c0_3] : memref<1x4x8x128xf32, #tpu.memory_space<vmem>>, vector<1x4x8x128xf32>
    %4 = vector.shape_cast %3 : vector<1x4x8x128xf32> to vector<4x8x128xf32>
    %c0_4 = arith.constant 0 : index
    %c0_5 = arith.constant 0 : index
    %c0_6 = arith.constant 0 : index
    %5 = vector.load %arg4[%c0_4, %c0_5, %c0_6] : memref<1x8x128xf32, #tpu.memory_space<vmem>>, vector<1x8x128xf32>
    %6 = vector.shape_cast %5 : vector<1x8x128xf32> to vector<8x128xf32>
    %7 = tpu.iota {dimensions = array<i32: 0>} : vector<4x8x128xi32>
    %8 = arith.sitofp %7 : vector<4x8x128xi32> to vector<4x8x128xf32>
    %9 = vector.shape_cast %6 : vector<8x128xf32> to vector<1x8x128xf32>
    %10 = vector.broadcast %9 : vector<1x8x128xf32> to vector<4x8x128xf32>
    %11 = arith.cmpf oeq, %10, %8 : vector<4x8x128xf32>
    %12 = arith.extui %11 : vector<4x8x128xi1> to vector<4x8x128xi32>
    %13 = arith.sitofp %12 : vector<4x8x128xi32> to vector<4x8x128xf32>
    %c0_7 = arith.constant 0 : index
    %c0_8 = arith.constant 0 : index
    %c0_9 = arith.constant 0 : index
    %14 = vector.load %arg6[%c0_7, %c0_8, %c0_9] : memref<4x8x128xf32, #tpu.memory_space<vmem>>, vector<4x8x128xf32>
    %15 = arith.mulf %13, %4 : vector<4x8x128xf32>
    %16 = vector.shape_cast %15 : vector<4x8x128xf32> to vector<4x1x8x128xf32>
    %cst = arith.constant dense<0.000000e+00> : vector<4x8x128xf32>
    %17 = vector.multi_reduction <add>, %16, %cst [1] : vector<4x1x8x128xf32> to vector<4x8x128xf32>
    %18 = arith.addf %14, %17 : vector<4x8x128xf32>
    %c0_10 = arith.constant 0 : index
    %c0_11 = arith.constant 0 : index
    %c0_12 = arith.constant 0 : index
    %19 = vector.load %arg6[%c0_10, %c0_11, %c0_12] : memref<4x8x128xf32, #tpu.memory_space<vmem>>, vector<4x8x128xf32>
    tpu.vector_store %arg6[%c0_10, %c0_11, %c0_12], %18 {strides = array<i32>} : memref<4x8x128xf32, #tpu.memory_space<vmem>>, vector<4x8x128xf32>,
    %c0_13 = arith.constant 0 : index
    %c0_14 = arith.constant 0 : index
    %c0_15 = arith.constant 0 : index
    %20 = vector.load %arg7[%c0_13, %c0_14, %c0_15] : memref<4x8x128xf32, #tpu.memory_space<vmem>>, vector<4x8x128xf32>
    %21 = arith.mulf %4, %4 : vector<4x8x128xf32>
    %22 = vector.shape_cast %21 : vector<4x8x128xf32> to vector<4x1x8x128xf32>
    %cst_16 = arith.constant dense<0.000000e+00> : vector<4x8x128xf32>
    %23 = vector.multi_reduction <add>, %22, %cst_16 [1] : vector<4x1x8x128xf32> to vector<4x8x128xf32>
    %24 = arith.addf %20, %23 : vector<4x8x128xf32>
    %c0_17 = arith.constant 0 : index
    %c0_18 = arith.constant 0 : index
    %c0_19 = arith.constant 0 : index
    %25 = vector.load %arg7[%c0_17, %c0_18, %c0_19] : memref<4x8x128xf32, #tpu.memory_space<vmem>>, vector<4x8x128xf32>
    tpu.vector_store %arg7[%c0_17, %c0_18, %c0_19], %24 {strides = array<i32>} : memref<4x8x128xf32, #tpu.memory_space<vmem>>, vector<4x8x128xf32>,
    %c0_20 = arith.constant 0 : index
    %c0_21 = arith.constant 0 : index
    %c0_22 = arith.constant 0 : index
    %26 = vector.load %arg8[%c0_20, %c0_21, %c0_22] : memref<4x8x128xf32, #tpu.memory_space<vmem>>, vector<4x8x128xf32>
    %27 = vector.shape_cast %13 : vector<4x8x128xf32> to vector<4x1x8x128xf32>
    %cst_23 = arith.constant dense<0.000000e+00> : vector<4x8x128xf32>
    %28 = vector.multi_reduction <add>, %27, %cst_23 [1] : vector<4x1x8x128xf32> to vector<4x8x128xf32>
    %29 = arith.addf %26, %28 : vector<4x8x128xf32>
    %c0_24 = arith.constant 0 : index
    %c0_25 = arith.constant 0 : index
    %c0_26 = arith.constant 0 : index
    %30 = vector.load %arg8[%c0_24, %c0_25, %c0_26] : memref<4x8x128xf32, #tpu.memory_space<vmem>>, vector<4x8x128xf32>
    tpu.vector_store %arg8[%c0_24, %c0_25, %c0_26], %29 {strides = array<i32>} : memref<4x8x128xf32, #tpu.memory_space<vmem>>, vector<4x8x128xf32>,
    %c0_i32_27 = arith.constant 0 : i32
    %31 = arith.cmpi eq, %arg2, %c0_i32_27 : i32
    %32 = arith.extui %31 : i1 to i32
    %c0_i32_28 = arith.constant 0 : i32
    %33 = arith.cmpi ne, %32, %c0_i32_28 : i32
    scf.if %33 {
      %c0_29 = arith.constant 0 : index
      %c0_30 = arith.constant 0 : index
      %c0_31 = arith.constant 0 : index
      %34 = vector.load %arg6[%c0_29, %c0_30, %c0_31] : memref<4x8x128xf32, #tpu.memory_space<vmem>>, vector<4x8x128xf32>
      %cst_32 = arith.constant dense<0.000000e+00> : vector<4x8xf32>
      %35 = vector.multi_reduction <add>, %34, %cst_32 [2] : vector<4x8x128xf32> to vector<4x8xf32>
      %cst_33 = arith.constant dense<0.000000e+00> : vector<4xf32>
      %36 = vector.multi_reduction <add>, %35, %cst_33 [1] : vector<4x8xf32> to vector<4xf32>
      %c0_34 = arith.constant 0 : index
      %c0_35 = arith.constant 0 : index
      %c0_36 = arith.constant 0 : index
      %c0_37 = arith.constant 0 : index
      %37 = vector.load %arg5[%c0_34, %c0_35, %c0_36, %c0_37] : memref<1x1x3x4xf32, #tpu.memory_space<vmem>>, vector<1x1x1x4xf32>
      %38 = vector.shape_cast %37 : vector<1x1x1x4xf32> to vector<4xf32>
      %39 = vector.shape_cast %36 : vector<4xf32> to vector<1x1x1x4xf32>
      tpu.vector_store %arg5[%c0_34, %c0_35, %c0_36, %c0_37], %39 {strides = array<i32>} : memref<1x1x3x4xf32, #tpu.memory_space<vmem>>, vector<1x1x1x4xf32>,
      %c0_38 = arith.constant 0 : index
      %c0_39 = arith.constant 0 : index
      %c0_40 = arith.constant 0 : index
      %40 = vector.load %arg7[%c0_38, %c0_39, %c0_40] : memref<4x8x128xf32, #tpu.memory_space<vmem>>, vector<4x8x128xf32>
      %cst_41 = arith.constant dense<0.000000e+00> : vector<4x8xf32>
      %41 = vector.multi_reduction <add>, %40, %cst_41 [2] : vector<4x8x128xf32> to vector<4x8xf32>
      %cst_42 = arith.constant dense<0.000000e+00> : vector<4xf32>
      %42 = vector.multi_reduction <add>, %41, %cst_42 [1] : vector<4x8xf32> to vector<4xf32>
      %c0_43 = arith.constant 0 : index
      %c0_44 = arith.constant 0 : index
      %c1 = arith.constant 1 : index
      %c0_45 = arith.constant 0 : index
      %43 = vector.load %arg5[%c0_43, %c0_44, %c1, %c0_45] : memref<1x1x3x4xf32, #tpu.memory_space<vmem>>, vector<1x1x1x4xf32>
      %44 = vector.shape_cast %43 : vector<1x1x1x4xf32> to vector<4xf32>
      %45 = vector.shape_cast %42 : vector<4xf32> to vector<1x1x1x4xf32>
      tpu.vector_store %arg5[%c0_43, %c0_44, %c1, %c0_45], %45 {strides = array<i32>} : memref<1x1x3x4xf32, #tpu.memory_space<vmem>>, vector<1x1x1x4xf32>,
      %c0_46 = arith.constant 0 : index
      %c0_47 = arith.constant 0 : index
      %c0_48 = arith.constant 0 : index
      %46 = vector.load %arg8[%c0_46, %c0_47, %c0_48] : memref<4x8x128xf32, #tpu.memory_space<vmem>>, vector<4x8x128xf32>
      %cst_49 = arith.constant dense<0.000000e+00> : vector<4x8xf32>
      %47 = vector.multi_reduction <add>, %46, %cst_49 [2] : vector<4x8x128xf32> to vector<4x8xf32>
      %cst_50 = arith.constant dense<0.000000e+00> : vector<4xf32>
      %48 = vector.multi_reduction <add>, %47, %cst_50 [1] : vector<4x8xf32> to vector<4xf32>
      %c0_51 = arith.constant 0 : index
      %c0_52 = arith.constant 0 : index
      %c2 = arith.constant 2 : index
      %c0_53 = arith.constant 0 : index
      %49 = vector.load %arg5[%c0_51, %c0_52, %c2, %c0_53] : memref<1x1x3x4xf32, #tpu.memory_space<vmem>>, vector<1x1x1x4xf32>
      %50 = vector.shape_cast %49 : vector<1x1x1x4xf32> to vector<4xf32>
      %51 = vector.shape_cast %48 : vector<4xf32> to vector<1x1x1x4xf32>
      tpu.vector_store %arg5[%c0_51, %c0_52, %c2, %c0_53], %51 {strides = array<i32>} : memref<1x1x3x4xf32, #tpu.memory_space<vmem>>, vector<1x1x1x4xf32>,
    } else {
    }
    return
  }
  func.func @transform_0(%arg0: i32, %arg1: i32, %arg2: i32) -> (i32, i32, i32, i32) {
    %c1_i32 = arith.constant 1 : i32
    %0 = arith.muli %arg1, %c1_i32 : i32
    %1 = arith.addi %0, %arg2 : i32
    %c0_i32 = arith.constant 0 : i32
    %c0_i32_0 = arith.constant 0 : i32
    %c0_i32_1 = arith.constant 0 : i32
    return %arg0, %c0_i32, %1, %c0_i32_0 : i32, i32, i32, i32
  }
  func.func @transform_1(%arg0: i32, %arg1: i32, %arg2: i32) -> (i32, i32, i32) {
    %c1_i32 = arith.constant 1 : i32
    %0 = arith.muli %arg1, %c1_i32 : i32
    %1 = arith.addi %0, %arg2 : i32
    %c0_i32 = arith.constant 0 : i32
    %c0_i32_0 = arith.constant 0 : i32
    return %arg0, %1, %c0_i32 : i32, i32, i32
  }
  func.func @transform_2(%arg0: i32, %arg1: i32, %arg2: i32) -> (i32, i32, i32, i32) {
    %c0_i32 = arith.constant 0 : i32
    %c0_i32_0 = arith.constant 0 : i32
    %c0_i32_1 = arith.constant 0 : i32
    return %arg0, %arg1, %c0_i32, %c0_i32_0 : i32, i32, i32, i32
  }
}

</mosaic_0001>

<llo_original>
// kernel: tpu_custom_call.1
$region0: #{tpu_custom_call.1}
  #allocation0 [shape = 'u32[]', space=smem, size = 0x4, offset = 0x4, fixed_abs, tag = 'smem constant byte address 0x4 - core index']
  #allocation1 [shape = 'u32[72,128]{1,0:T(1,128)}', space=vmem, size = 0x9000, scoped, tag = 'internal scratch']
  #allocation2 [shape = 'f32[4,8,128]{2,1,0:T(8,128)}', space=vmem, size = 0x4000, scoped, tag = 'scratch operand']
  #allocation3 [shape = 'f32[4,8,128]{2,1,0:T(8,128)}', space=vmem, size = 0x4000, scoped, tag = 'scratch operand']
  #allocation4 [shape = 'f32[4,8,128]{2,1,0:T(8,128)}', space=vmem, size = 0x4000, scoped, tag = 'scratch operand']
  %s0 = inlined_call_operand.hbm [shape: f32[2,4,8,128], index: 0, kind: input, shape index: {}]
  %s1 = inlined_call_operand.hbm [shape: f32[2,8,128], index: 1, kind: input, shape index: {}]
  %s2 = inlined_call_operand.vmem [shape: f32[2,1,3,4], index: 2, kind: output, shape index: {}]
  %s3 = sld [smem:[#allocation0]]
  $region57: #{tpu_custom_call.1} parent=0
    _
  %s5 = ssub.s32 1, %s3
  %s6 = scalar_select 0, %s5, %s3
  $region1: #{tpu_custom_call.1} parent=0
    #allocation5 [shape = 'u8[32768]{0}', space=vmem, size = 0x8000, scoped, tag = 'input window, operand 0']
    #allocation6 [shape = 's32[2]{0}', space=sflag, size = 0x8, scoped, tag = 'scoped memory for tpu_custom_call.1']
    #allocation7 [shape = 'u8[8192]{0}', space=vmem, size = 0x2000, scoped, tag = 'input window, operand 1']
    #allocation8 [shape = 's32[2]{0}', space=sflag, size = 0x8, scoped, tag = 'scoped memory for tpu_custom_call.1']
    %7 = vsyncpa [#allocation6], 0
    %s8 = scalar_lea.sflag [#allocation6], 1
    %9 = vsyncpa %s8, 0
    %10 = vsyncpa [#allocation8], 0
    %s11 = scalar_lea.sflag [#allocation8], 1
    %12 = vsyncpa %s11, 0
    loop: start=0, step=1, limit=4
    $region2: #{tpu_custom_call.1} parent=1 // loop_pre_header
      _
    $region3: #{tpu_custom_call.1} parent=1 // loop_header
      %s14 = sphi 0, %s18
      %p15 = scmp.ge.s32.totalorder %s14, 4
      %s21 = sphi 0, %s40
      %s22 = sphi 0, %s36
      %s23 = sphi 0, %s32
      %s24 = sphi 0, %s21
      %s25 = sphi 0, %s22
      %s26 = sphi 0, %s23
      %s27 = sphi 0, %s24
      %s28 = sphi 0, %s25
      %s29 = sphi 0, %s26
      %s47 = sphi 0, %s49
      %s50 = sphi 0, %s47
      %s51 = sphi 0, %s50
      %s67 = sphi 0, %s51
      %s77 = sphi 0, %s79
      %s80 = sphi 0, %s77
      %s81 = sphi 0, %s80
      %s97 = sphi 0, %s81
      %s105 = sphi 0, %s107
      %s108 = sphi 0, %s105
      %s109 = sphi 0, %s108
      %s125 = sphi 0, %s109
    $region4: #{tpu_custom_call.1} parent=1 // loop_header_branch
      %17 = sbr.rel (%p15) target = $region8
    $region5: #{tpu_custom_call.1} parent=1 // loop_body
      %s19 = ssub.s32 %s14, 1
      %s20 = ssub.s32 %s14, 2
      %s30 = sadd.s32 1, %s23
      %p31 = scmp.ge.s32.totalorder %s30, 1
      %s32 = scalar_select %p31, 0, %s30
      %s33 = sadd.s32 1, %s22
      %s34 = scalar_select %p31, %s33, %s22
      %p35 = scmp.ge.s32.totalorder %s34, 1
      %s36 = scalar_select %p35, 0, %s34
      %s37 = sadd.s32 1, %s21
      %s38 = scalar_select %p35, %s37, %s21
      %p39 = scmp.ge.s32.totalorder %s38, 2
      %s40 = scalar_select %p39, 0, %s38
      %s41 = sadd.s32 %s22, %s23
      %s42 = sadd.s32 %s36, %s32
      %s43 = ssub.s32 %s21, %s40
      %s44 = ssub.s32 %s41, %s42
      %s45 = sor.u32 %s43, %s44
      %p46 = scmp.eq.s32.totalorder %s45, 0
      %s48 = sadd.s32 %s47, 1
      %s49 = scalar_select %p46, %s47, %s48
      %p52 = pneg %p46
      %p53 = scmp.eq.s32.totalorder %s14, 1
      %p54 = por %p52, %p53
      %p55 = scmp.ne.s32.totalorder %s47, %s50
      %p56 = scmp.eq.s32.totalorder %s14, 0
      %p57 = por %p55, %p56
      %p58 = scmp.ne.s32.totalorder %s47, %s50
      %p59 = scmp.eq.s32.totalorder %s19, 1
      %p60 = por %p58, %p59
      %p61 = scmp.ne.s32.totalorder %s50, %s51
      %p62 = scmp.eq.s32.totalorder %s19, 0
      %p63 = por %p61, %p62
      %p64 = scmp.ne.s32.totalorder %s50, %s51
      %p65 = scmp.eq.s32.totalorder %s20, 1
      %p66 = por %p64, %p65
      %p68 = scmp.ne.s32.totalorder %s51, %s67
      %p69 = scmp.eq.s32.totalorder %s20, 0
      %p70 = por %p68, %p69
      %s71 = sadd.s32 %s22, %s23
      %s72 = sadd.s32 %s36, %s32
      %s73 = ssub.s32 %s21, %s40
      %s74 = ssub.s32 %s71, %s72
      %s75 = sor.u32 %s73, %s74
      %p76 = scmp.eq.s32.totalorder %s75, 0
      %s78 = sadd.s32 %s77, 1
      %s79 = scalar_select %p76, %s77, %s78
      %p82 = pneg %p76
      %p83 = scmp.eq.s32.totalorder %s14, 1
      %p84 = por %p82, %p83
      %p85 = scmp.ne.s32.totalorder %s77, %s80
      %p86 = scmp.eq.s32.totalorder %s14, 0
      %p87 = por %p85, %p86
      %p88 = scmp.ne.s32.totalorder %s77, %s80
      %p89 = scmp.eq.s32.totalorder %s19, 1
      %p90 = por %p88, %p89
      %p91 = scmp.ne.s32.totalorder %s80, %s81
      %p92 = scmp.eq.s32.totalorder %s19, 0
      %p93 = por %p91, %p92
      %p94 = scmp.ne.s32.totalorder %s80, %s81
      %p95 = scmp.eq.s32.totalorder %s20, 1
      %p96 = por %p94, %p95
      %p98 = scmp.ne.s32.totalorder %s81, %s97
      %p99 = scmp.eq.s32.totalorder %s20, 0
      %p100 = por %p98, %p99
      %s101 = ssub.s32 %s21, %s40
      %s102 = ssub.s32 %s22, %s36
      %s103 = sor.u32 %s101, %s102
      %p104 = scmp.eq.s32.totalorder %s103, 0
      %s106 = sadd.s32 %s105, 1
      %s107 = scalar_select %p104, %s105, %s106
      %p110 = pneg %p104
      %p111 = scmp.eq.s32.totalorder %s14, 1
      %p112 = por %p110, %p111
      %p113 = scmp.ne.s32.totalorder %s105, %s108
      %p114 = scmp.eq.s32.totalorder %s14, 0
      %p115 = por %p113, %p114
      %p116 = scmp.ne.s32.totalorder %s105, %s108
      %p117 = scmp.eq.s32.totalorder %s19, 1
      %p118 = por %p116, %p117
      %p119 = scmp.ne.s32.totalorder %s108, %s109
      %p120 = scmp.eq.s32.totalorder %s19, 0
      %p121 = por %p119, %p120
      %p122 = scmp.ne.s32.totalorder %s108, %s109
      %p123 = scmp.eq.s32.totalorder %s20, 1
      %p124 = por %p122, %p123
      %p126 = scmp.ne.s32.totalorder %s109, %s125
      %p127 = scmp.eq.s32.totalorder %s20, 0
      %p128 = por %p126, %p127
      %p129 = scmp.le.s32.totalorder 1, %s14
      %p130 = scmp.lt.s32.totalorder %s14, 3
      %p131 = pnand %p129, %p130
      %p132 = pneg %p131
      // Predicated region
      $region9: #{tpu_custom_call.1} parent=5 // pred_check
        _
      $region10: #{tpu_custom_call.1} parent=5 // pred_check_branch
        %134 = sbr.rel (%p131) target = $region12
      $region11: #{tpu_custom_call.1} parent=5 // pred_region
        %s135 = ssub.s32 %s14, 1
      $region12: #{tpu_custom_call.1} parent=5 // pred_fallthru
        _
      %p136 = scmp.lt.s32.totalorder %s14, 2
      // Predicated region
      $region13: #{tpu_custom_call.1} parent=5 // pred_check
        %p137 = pneg %p136
      $region14: #{tpu_custom_call.1} parent=5 // pred_check_branch
        %139 = sbr.rel (%p137) target = $region16
      $region15: #{tpu_custom_call.1} parent=5 // pred_region
        // Predicated region
        $region17: #{tpu_custom_call.1} parent=15 // pred_check
          %p140 = pneg %p57
        $region18: #{tpu_custom_call.1} parent=15 // pred_check_branch
          %142 = sbr.rel (%p140) target = $region20
        $region19: #{tpu_custom_call.1} parent=15 // pred_region
          %s143 = sand.u32 %s47, 1
          %s144 = scalar_lea.sflag [#allocation6], %s143
          %s145 = sand.u32 %s47, 1
          %s146 = smul.addr %s145, 32
          %s147 = scalar_lea.vmem [#allocation5], %s146
          %s148 = sadd.s32 %s22, %s23
          %150 = vsyncadd %s144, 0
          %s151 = smul.addr %s21, 4
          %s152 = sadd.s32 %s148, %s151
          %s153 = smul.addr %s152, 8
          %s154 = scalar_lea.hbm %s0, %s153
          %s155 = sshll.u32 %s154, 4
          %s156 = int_to_ptr.hbm [resolvable:$true] %s155
          %s157 = sshll.u32 %s147, 4
          %s158 = int_to_ptr.vmem [resolvable:$true] %s157
          %163 = dma.hbm_to_vmem [thread:$0]  %s156, 512, %s158, %s144, 128, 128, 8
        $region20: #{tpu_custom_call.1} parent=15 // pred_fallthru
          _
        // Predicated region
        $region21: #{tpu_custom_call.1} parent=15 // pred_check
          %p164 = pneg %p87
        $region22: #{tpu_custom_call.1} parent=15 // pred_check_branch
          %166 = sbr.rel (%p164) target = $region24
        $region23: #{tpu_custom_call.1} parent=15 // pred_region
          %s167 = sand.u32 %s77, 1
          %s168 = scalar_lea.sflag [#allocation8], %s167
          %s169 = sand.u32 %s77, 1
          %s170 = smul.addr %s169, 8
          %s171 = scalar_lea.vmem [#allocation7], %s170
          %s172 = sadd.s32 %s22, %s23
          %174 = vsyncadd %s168, 0
          %s175 = sadd.s32 %s172, %s21
          %s176 = smul.addr %s175, 8
          %s177 = scalar_lea.hbm %s1, %s176
          %s179 = sshll.u32 %s177, 4
          %s180 = int_to_ptr.hbm [resolvable:$true] %s179
          %s181 = sshll.u32 %s171, 4
          %s182 = int_to_ptr.vmem [resolvable:$true] %s181
          %184 = dma.hbm_to_vmem [thread:$0]  %s180, 128, %s182, %s168
        $region24: #{tpu_custom_call.1} parent=15 // pred_fallthru
          _
      $region16: #{tpu_custom_call.1} parent=5 // pred_fallthru
        _
      %p185 = scmp.le.s32.totalorder 1, %s14
      %p186 = scmp.lt.s32.totalorder %s14, 3
      %p187 = pnand %p185, %p186
      %p188 = pneg %p187
      // Predicated region
      $region25: #{tpu_custom_call.1} parent=5 // pred_check
        _
      $region26: #{tpu_custom_call.1} parent=5 // pred_check_branch
        %190 = sbr.rel (%p187) target = $region28
      $region27: #{tpu_custom_call.1} parent=5 // pred_region
        %s191 = ssub.s32 %s14, 1
        %s192 = sand.u32 %s50, 1
        %s193 = scalar_lea.sflag [#allocation6], %s192
        %s194 = sand.u32 %s50, 1
        %s195 = smul.addr %s194, 32
        %s196 = scalar_lea.vmem [#allocation5], %s195
        // Predicated region
        $region29: #{tpu_custom_call.1} parent=27 // pred_check
          %p197 = pneg %p63
        $region30: #{tpu_custom_call.1} parent=27 // pred_check_branch
          %199 = sbr.rel (%p197) target = $region32
        $region31: #{tpu_custom_call.1} parent=27 // pred_region
          %201 = dma.done %s193, 512
        $region32: #{tpu_custom_call.1} parent=27 // pred_fallthru
          _
        %s202 = sand.u32 %s80, 1
        %s203 = scalar_lea.sflag [#allocation8], %s202
        %s204 = sand.u32 %s80, 1
        %s205 = smul.addr %s204, 8
        %s206 = scalar_lea.vmem [#allocation7], %s205
        // Predicated region
        $region33: #{tpu_custom_call.1} parent=27 // pred_check
          %p207 = pneg %p93
        $region34: #{tpu_custom_call.1} parent=27 // pred_check_branch
          %209 = sbr.rel (%p207) target = $region36
        $region35: #{tpu_custom_call.1} parent=27 // pred_region
          %211 = dma.done %s203, 128
        $region36: #{tpu_custom_call.1} parent=27 // pred_fallthru
          _
        %s212 = sand.u32 %s50, 1
        %s213 = scalar_lea.sflag [#allocation6], %s212
        %s214 = sand.u32 %s50, 1
        %s215 = smul.addr %s214, 32
        %s216 = scalar_lea.vmem [#allocation5], %s215
        %p217 = pneg %p63
        %p218 = pneg %p60
        %s219 = sand.u32 %s80, 1
        %s220 = scalar_lea.sflag [#allocation8], %s219
        %s221 = sand.u32 %s80, 1
        %s222 = smul.addr %s221, 8
        %s223 = scalar_lea.vmem [#allocation7], %s222
        %p224 = pneg %p93
        %p225 = pneg %p90
        %p226 = pneg %p121
        %p227 = pneg %p118
        %p228 = scmp.lt.s32.totalorder %s24, 1
        %s229 = scalar_select %p228, %s24, 1
        %p230 = scmp.lt.s32.totalorder %s25, 0
        %s231 = scalar_select %p230, %s25, 0
        %s232 = sadd.s32 %s231, %s229
        %s233 = smul.addr %s232, 4
        %s234 = scalar_lea.vmem %s2, %s233
        %s235 = sadd.s32 %s25, %s26
        %s236 = sadd.s32 %s25, %s26
        %p237 = scmp.lt.s32.totalorder %s24, 1
        %s238 = scalar_select %p237, %s24, 1
        %p239 = scmp.lt.s32.totalorder %s25, 0
        %s240 = scalar_select %p239, %s25, 0
        %s241 = sadd.s32 %s240, %s238
        %s242 = smul.addr %s241, 4
        %s243 = scalar_lea.vmem %s2, %s242
        %p244 = scmp.eq.s32.totalorder %s26, 0
        // Predicated region
        $region37: #{tpu_custom_call.1} parent=27 // pred_check
          %p245 = pneg %p244
        $region38: #{tpu_custom_call.1} parent=27 // pred_check_branch
          %247 = sbr.rel (%p245) target = $region40
        $region39: #{tpu_custom_call.1} parent=27 // pred_region
          %248 = vst [vmem:[#allocation2] sm:$0xff] 0.0
          %249 = vst [vmem:[#allocation2 + $0x8] sm:$0xff] 0.0
          %250 = vst [vmem:[#allocation2 + $0x10] sm:$0xff] 0.0
          %251 = vst [vmem:[#allocation2 + $0x18] sm:$0xff] 0.0
          %252 = vst [vmem:[#allocation3] sm:$0xff] 0.0
          %253 = vst [vmem:[#allocation3 + $0x8] sm:$0xff] 0.0
          %254 = vst [vmem:[#allocation3 + $0x10] sm:$0xff] 0.0
          %255 = vst [vmem:[#allocation3 + $0x18] sm:$0xff] 0.0
          %256 = vst [vmem:[#allocation4] sm:$0xff] 0.0
          %257 = vst [vmem:[#allocation4 + $0x8] sm:$0xff] 0.0
          %258 = vst [vmem:[#allocation4 + $0x10] sm:$0xff] 0.0
          %259 = vst [vmem:[#allocation4 + $0x18] sm:$0xff] 0.0
        $region40: #{tpu_custom_call.1} parent=27 // pred_fallthru
          _
        %v260 = vld [vmem:[%s196] sm:$0xff]
        %v261 = vld [vmem:[%s196 + $0x8] sm:$0xff]
        %v262 = vld [vmem:[%s196 + $0x10] sm:$0xff]
        %v263 = vld [vmem:[%s196 + $0x18] sm:$0xff]
        %v264 = vld [vmem:[%s206] sm:$0xff]
        %v265 = vcvt.s32.f32 0
        %v266 = vcvt.s32.f32 1
        %v267 = vcvt.s32.f32 2
        %v268 = vcvt.s32.f32 3
        %vm269 = vcmp.eq.f32.partialorder %v264, %v265
        %vm270 = vcmp.eq.f32.partialorder %v264, %v266
        %vm271 = vcmp.eq.f32.partialorder %v264, %v267
        %vm272 = vcmp.eq.f32.partialorder %v264, %v268
        %v273 = vsel %vm269, 1, 0
        %v274 = vsel %vm270, 1, 0
        %v275 = vsel %vm271, 1, 0
        %v276 = vsel %vm272, 1, 0
        %v277 = vcvt.s32.f32 %v273
        %v278 = vcvt.s32.f32 %v274
        %v279 = vcvt.s32.f32 %v275
        %v280 = vcvt.s32.f32 %v276
        %v281 = vld [vmem:[#allocation2] sm:$0xff]
        %v282 = vld [vmem:[#allocation2 + $0x8] sm:$0xff]
        %v283 = vld [vmem:[#allocation2 + $0x10] sm:$0xff]
        %v284 = vld [vmem:[#allocation2 + $0x18] sm:$0xff]
        %v285 = vmul.f32 %v277, %v260
        %v286 = vmul.f32 %v278, %v261
        %v287 = vmul.f32 %v279, %v262
        %v288 = vmul.f32 %v280, %v263
        %v289 = vadd.f32 %v285, 0.0
        %v290 = vadd.f32 %v286, 0.0
        %v291 = vadd.f32 %v287, 0.0
        %v292 = vadd.f32 %v288, 0.0
        %v293 = vadd.f32 %v281, %v289
        %v294 = vadd.f32 %v282, %v290
        %v295 = vadd.f32 %v283, %v291
        %v296 = vadd.f32 %v284, %v292
        %297 = vst [vmem:[#allocation2] sm:$0xff] %v293
        %298 = vst [vmem:[#allocation2 + $0x8] sm:$0xff] %v294
        %299 = vst [vmem:[#allocation2 + $0x10] sm:$0xff] %v295
        %300 = vst [vmem:[#allocation2 + $0x18] sm:$0xff] %v296
        %v301 = vld [vmem:[#allocation3] sm:$0xff]
        %v302 = vld [vmem:[#allocation3 + $0x8] sm:$0xff]
        %v303 = vld [vmem:[#allocation3 + $0x10] sm:$0xff]
        %v304 = vld [vmem:[#allocation3 + $0x18] sm:$0xff]
        %v305 = vmul.f32 %v260, %v260
        %v306 = vmul.f32 %v261, %v261
        %v307 = vmul.f32 %v262, %v262
        %v308 = vmul.f32 %v263, %v263
        %v309 = vadd.f32 %v305, 0.0
        %v310 = vadd.f32 %v306, 0.0
        %v311 = vadd.f32 %v307, 0.0
        %v312 = vadd.f32 %v308, 0.0
        %v313 = vadd.f32 %v301, %v309
        %v314 = vadd.f32 %v302, %v310
        %v315 = vadd.f32 %v303, %v311
        %v316 = vadd.f32 %v304, %v312
        %317 = vst [vmem:[#allocation3] sm:$0xff] %v313
        %318 = vst [vmem:[#allocation3 + $0x8] sm:$0xff] %v314
        %319 = vst [vmem:[#allocation3 + $0x10] sm:$0xff] %v315
        %320 = vst [vmem:[#allocation3 + $0x18] sm:$0xff] %v316
        %v321 = vld [vmem:[#allocation4] sm:$0xff]
        %v322 = vld [vmem:[#allocation4 + $0x8] sm:$0xff]
        %v323 = vld [vmem:[#allocation4 + $0x10] sm:$0xff]
        %v324 = vld [vmem:[#allocation4 + $0x18] sm:$0xff]
        %v325 = vadd.f32 %v277, 0.0
        %v326 = vadd.f32 %v278, 0.0
        %v327 = vadd.f32 %v279, 0.0
        %v328 = vadd.f32 %v280, 0.0
        %v329 = vadd.f32 %v321, %v325
        %v330 = vadd.f32 %v322, %v326
        %v331 = vadd.f32 %v323, %v327
        %v332 = vadd.f32 %v324, %v328
        %333 = vst [vmem:[#allocation4] sm:$0xff] %v329
        %334 = vst [vmem:[#allocation4 + $0x8] sm:$0xff] %v330
        %335 = vst [vmem:[#allocation4 + $0x10] sm:$0xff] %v331
        %336 = vst [vmem:[#allocation4 + $0x18] sm:$0xff] %v332
        // Predicated region
        $region41: #{tpu_custom_call.1} parent=27 // pred_check
          %p337 = pneg %p244
        $region42: #{tpu_custom_call.1} parent=27 // pred_check_branch
          %339 = sbr.rel (%p337) target = $region44
        $region43: #{tpu_custom_call.1} parent=27 // pred_region
          %v340 = vld [vmem:[#allocation2] sm:$0xff]
          %v341 = vld [vmem:[#allocation2 + $0x8] sm:$0xff]
          %v342 = vld [vmem:[#allocation2 + $0x10] sm:$0xff]
          %v343 = vld [vmem:[#allocation2 + $0x18] sm:$0xff]
          %344 = vadd.xlane.f32.xlu0 %v340
          %v345 = vpop.xlane.xlu0 %344
          %346 = vadd.xlane.f32.xlu0 %v341
          %v347 = vpop.xlane.xlu0 %346
          %348 = vadd.xlane.f32.xlu0 %v342
          %v349 = vpop.xlane.xlu0 %348
          %350 = vadd.xlane.f32.xlu0 %v343
          %v351 = vpop.xlane.xlu0 %350
          %v356 = vlaneseq
          %v357 = vand.u32 %v356, 127
          %v358 = vperm.slane %v345, %v357
          %v359 = vperm.slane %v347, %v357
          %v360 = vperm.slane %v349, %v357
          %v361 = vperm.slane %v351, %v357
          %vm362 = vcmask 1041409
          %v363 = vsel %vm362, %v359, %v358
          %vm364 = vcmask 1042434
          %v365 = vsel %vm364, %v360, %v363
          %vm366 = vcmask 1043459
          %v367 = vsel %vm366, %v361, %v365
          %vm369 = vcmask 60416
          %v370 = vsel %vm369, %v367, 0.0
          %371 = vadd.xlane.f32.xlu0 %v370
          %v372 = vpop.xlane.xlu0 %371
          %v374 = vperm.slane %v372, %v357
          %vm376 = vcmask 24576
          %377 = vst.msk [vmem:[%s243] sm:$0x1] %vm376, %v374
          %v378 = vld [vmem:[#allocation3] sm:$0xff]
          %v379 = vld [vmem:[#allocation3 + $0x8] sm:$0xff]
          %v380 = vld [vmem:[#allocation3 + $0x10] sm:$0xff]
          %v381 = vld [vmem:[#allocation3 + $0x18] sm:$0xff]
          %382 = vadd.xlane.f32.xlu0 %v378
          %v383 = vpop.xlane.xlu0 %382
          %384 = vadd.xlane.f32.xlu0 %v379
          %v385 = vpop.xlane.xlu0 %384
          %386 = vadd.xlane.f32.xlu0 %v380
          %v387 = vpop.xlane.xlu0 %386
          %388 = vadd.xlane.f32.xlu0 %v381
          %v389 = vpop.xlane.xlu0 %388
          %v394 = vperm.slane %v383, %v357
          %v395 = vperm.slane %v385, %v357
          %v396 = vperm.slane %v387, %v357
          %v397 = vperm.slane %v389, %v357
          %v398 = vsel %vm362, %v395, %v394
          %v399 = vsel %vm364, %v396, %v398
          %v400 = vsel %vm366, %v397, %v399
          %v402 = vsel %vm369, %v400, 0.0
          %403 = vadd.xlane.f32.xlu0 %v402
          %v404 = vpop.xlane.xlu0 %403
          %v406 = vperm.slane %v404, %v357
          %408 = vst.msk [vmem:[%s243 + $0x1] sm:$0x1] %vm376, %v406
          %v409 = vld [vmem:[#allocation4] sm:$0xff]
          %v410 = vld [vmem:[#allocation4 + $0x8] sm:$0xff]
          %v411 = vld [vmem:[#allocation4 + $0x10] sm:$0xff]
          %v412 = vld [vmem:[#allocation4 + $0x18] sm:$0xff]
          %413 = vadd.xlane.f32.xlu0 %v409
          %v414 = vpop.xlane.xlu0 %413
          %415 = vadd.xlane.f32.xlu0 %v410
          %v416 = vpop.xlane.xlu0 %415
          %417 = vadd.xlane.f32.xlu0 %v411
          %v418 = vpop.xlane.xlu0 %417
          %419 = vadd.xlane.f32.xlu0 %v412
          %v420 = vpop.xlane.xlu0 %419
          %v425 = vperm.slane %v414, %v357
          %v426 = vperm.slane %v416, %v357
          %v427 = vperm.slane %v418, %v357
          %v428 = vperm.slane %v420, %v357
          %v429 = vsel %vm362, %v426, %v425
          %v430 = vsel %vm364, %v427, %v429
          %v431 = vsel %vm366, %v428, %v430
          %v433 = vsel %vm369, %v431, 0.0
          %434 = vadd.xlane.f32.xlu0 %v433
          %v435 = vpop.xlane.xlu0 %434
          %v437 = vperm.slane %v435, %v357
          %439 = vst.msk [vmem:[%s243 + $0x2] sm:$0x1] %vm376, %v437
        $region44: #{tpu_custom_call.1} parent=27 // pred_fallthru
          _
        %p440 = scmp.lt.s32.totalorder %s24, 1
        %s441 = scalar_select %p440, %s24, 1
        %p442 = scmp.lt.s32.totalorder %s25, 0
        %s443 = scalar_select %p442, %s25, 0
        %s444 = sadd.s32 %s443, %s441
        %s445 = smul.addr %s444, 4
        %s446 = scalar_lea.vmem %s2, %s445
        // Predicated region
        $region45: #{tpu_custom_call.1} parent=27 // pred_check
          %p447 = pneg %p118
        $region46: #{tpu_custom_call.1} parent=27 // pred_check_branch
          %449 = sbr.rel (%p447) target = $region48
        $region47: #{tpu_custom_call.1} parent=27 // pred_region
          _
        $region48: #{tpu_custom_call.1} parent=27 // pred_fallthru
          _
      $region28: #{tpu_custom_call.1} parent=5 // pred_fallthru
        _
      %p450 = scmp.le.s32.totalorder 2, %s14
      // Predicated region
      $region49: #{tpu_custom_call.1} parent=5 // pred_check
        %p451 = pneg %p450
      $region50: #{tpu_custom_call.1} parent=5 // pred_check_branch
        %453 = sbr.rel (%p451) target = $region52
      $region51: #{tpu_custom_call.1} parent=5 // pred_region
        %s454 = ssub.s32 %s14, 2
        // Predicated region
        $region53: #{tpu_custom_call.1} parent=51 // pred_check
          %p455 = pneg %p124
        $region54: #{tpu_custom_call.1} parent=51 // pred_check_branch
          %457 = sbr.rel (%p455) target = $region56
        $region55: #{tpu_custom_call.1} parent=51 // pred_region
          %p458 = scmp.lt.s32.totalorder %s27, 1
          %s459 = scalar_select %p458, %s27, 1
          %p460 = scmp.lt.s32.totalorder %s28, 0
          %s461 = scalar_select %p460, %s28, 0
          %s462 = sadd.s32 %s461, %s459
          %s463 = smul.addr %s462, 4
          %s464 = scalar_lea.vmem %s2, %s463
        $region56: #{tpu_custom_call.1} parent=51 // pred_fallthru
          _
      $region52: #{tpu_custom_call.1} parent=5 // pred_fallthru
        _
    $region6: #{tpu_custom_call.1} parent=1 // loop_footer
      %s18 = sadd.s32 1, %s14
    $region7: #{tpu_custom_call.1} parent=1 // loop_footer_branch
      %13 = sbr.rel target = $region3
    $region8: #{tpu_custom_call.1} parent=1 // loop_exit
      _
    %465 = vsyncpa [#allocation6], 1
    %s466 = scalar_lea.sflag [#allocation6], 1
    %467 = vsyncpa %s466, 1
    %468 = vsyncpa [#allocation8], 1
    %s469 = scalar_lea.sflag [#allocation8], 1
    %470 = vsyncpa %s469, 1

</llo_original>
